<compile_context>
chip_gen: v7x
topology: tpu7x:2x2x1
jax: 0.10.0
libtpu: 0.0.40
codegen_flags: <defaults>
</compile_context>

<pallas_src>
import functools

import jax
import jax.numpy as jnp
from jax import lax
from jax.experimental import pallas as pl
from jax.experimental.pallas import tpu as pltpu

EPS = 1e-5


# ----------------------------------------------------------------------------
# Budgets / tiling helpers
# ----------------------------------------------------------------------------

def _round_up(x, m):
    return (x + m - 1) // m * m


def _hw_budgets():
    """(per-block byte budget, scoped-VMEM limit), generation aware.

    v5e/v6e have 128 MiB VMEM; v7x has 64 MiB per TensorCore.  Keep the
    double-buffered in-flight footprint (2*in + 2*out + param rows) well under
    the scoped limit on every generation; fall back to v7x-safe values if the
    hardware query is unavailable.
    """
    vmem_cap = 64 << 20
    try:
        info = pltpu.get_tpu_info()
        vmem_cap = int(getattr(info, "vmem_capacity_bytes", vmem_cap))
    except Exception:
        pass
    if vmem_cap >= (128 << 20):          # v5e / v6e
        return 6 << 20, 48 << 20
    return 4 << 20, 32 << 20             # v7x (64 MiB) or unknown


def _choose_feature_tile(n_rows, f, max_block_bytes):
    """Pick a lane-dense feature tile TF for an (n_rows, TF) f32 block.

    Returns None when even a 128-lane block would exceed `max_block_bytes`
    (caller falls back to the streaming/large-N path).  Never pads HBM arrays:
    if f % TF != 0 the last grid step is a ragged block (OOB lanes dropped).
    """
    if f < 128:
        # Narrow feature dim: one full-width block (block dim == array dim is
        # exempt from the 128-lane rule).  Stores are masked but the shape is tiny.
        return f if n_rows * f * 4 <= max_block_bytes else None

    cap = (max_block_bytes // (4 * n_rows)) // 128 * 128
    if cap < 128:
        return None

    f128 = _round_up(f, 128)
    limit = min(cap, f128)
    candidates = list(range(128, limit + 1, 128))
    if f % 128 == 0:
        # Only tiles that divide F exactly -> zero padded HBM traffic.
        candidates = [t for t in candidates if f % t == 0]

    # Prefer >= 2 grid steps so the "parallel" feature axis can shard across
    # both v7x TensorCores; among those take the largest tile (fewest steps,
    # least fixed per-step overhead).
    multi = [t for t in candidates if pl.cdiv(f, t) >= 2]
    pool = multi if multi else candidates
    return max(pool)


def _choose_stream_tiles(n, f, max_block_bytes):
    """(TB, TF) for the streaming large-N path; TB is a multiple of 8."""
    tb = min(_round_up(n, 8), 1024)
    while True:
        tf = _choose_feature_tile(tb, f, max_block_bytes)
        if tf is not None:
            return tb, tf
        if tb <= 8:
            raise ValueError("feature dimension too large for the VMEM block budget")
        tb = max(8, _round_up(tb // 2, 8))


# ----------------------------------------------------------------------------
# Kernels
# ----------------------------------------------------------------------------

def _bn1d_block_kernel(gamma_ref, x_ref, beta_ref, y_ref):
    """Whole batch resident in one (N, TF) block; per-feature stats in-block."""
    x = x_ref[...].astype(jnp.float32)
    n = x.shape[0]

    mu = jnp.mean(x, axis=0, keepdims=True)                        # (1, TF)
    diff = x - mu                                                  # (N, TF)
    var = jnp.sum(diff * diff, axis=0, keepdims=True) / (n - 1)    # unbiased (torch.var)

    # Fold scalar gamma into inv_std: the scalar multiply lands on the (1, TF)
    # row, rsqrt goes to the EUP slot.
    scale = gamma_ref[0] * lax.rsqrt(var + EPS)                    # (1, TF)
    y_ref[...] = (diff * scale + beta_ref[...].astype(jnp.float32)).astype(y_ref.dtype)


def _bn1d_stats_kernel(gamma_ref, x_ref, beta_ref, scale_ref, bias_ref,
                       sum_ref, ssq_ref, *, n_total):
    """Streaming pass 1: accumulate sum / sum-of-squares over batch blocks,
    finalize per-feature scale/bias on the last batch step."""
    b = pl.program_id(1)                                           # batch axis ("arbitrary")

    @pl.when(b == 0)
    def _():
        sum_ref[...] = jnp.zeros_like(sum_ref)
        ssq_ref[...] = jnp.zeros_like(ssq_ref)

    x = x_ref[...].astype(jnp.float32)
    tb = x.shape[0]
    # Mask rows past the end of the batch (ragged last block reads unspecified data).
    valid = n_total - b * tb
    rows = lax.broadcasted_iota(jnp.int32, x.shape, 0)
    x = jnp.where(rows < valid, x, 0.0)

    sum_ref[...] += jnp.sum(x, axis=0, keepdims=True)
    ssq_ref[...] += jnp.sum(x * x, axis=0, keepdims=True)

    @pl.when(b == pl.num_programs(1) - 1)
    def _():
        n = jnp.float32(n_total)
        mu = sum_ref[...] / n
        var = (ssq_ref[...] - n * mu * mu) / (n - 1.0)             # unbiased (torch.var)
        scale = gamma_ref[0] * lax.rsqrt(var + EPS)
        scale_ref[...] = scale
        bias_ref[...] = beta_ref[...].astype(jnp.float32) - mu * scale


def _bn1d_apply_kernel(x_ref, scale_ref, bias_ref, y_ref):
    """Streaming pass 2: y = x * scale + bias."""
    x = x_ref[...].astype(jnp.float32)
    y_ref[...] = (x * scale_ref[...] + bias_ref[...]).astype(y_ref.dtype)


# ----------------------------------------------------------------------------
# Wrappers
# ----------------------------------------------------------------------------

def _bn1d_single_block(x, gamma, beta2d, tf, vmem_limit):
    N, F = x.shape
    nf = pl.cdiv(F, tf)
    cost = pl.CostEstimate(flops=6 * N * F, transcendentals=F,
                           bytes_accessed=(2 * N * F + F + 1) * 4)
    return pl.pallas_call(
        _bn1d_block_kernel,
        out_shape=jax.ShapeDtypeStruct((N, F), x.dtype),
        grid=(nf,),
        in_specs=[
            pl.BlockSpec(memory_space=pltpu.MemorySpace.SMEM),      # gamma scalar
            pl.BlockSpec((N, tf), lambda j: (0, j)),                # x feature tile
            pl.BlockSpec((1, tf), lambda j: (0, j)),                # beta row tile
        ],
        out_specs=pl.BlockSpec((N, tf), lambda j: (0, j)),
        compiler_params=pltpu.CompilerParams(
            dimension_semantics=("parallel",),
            vmem_limit_bytes=vmem_limit,
        ),
        cost_estimate=cost,
    )(gamma, x, beta2d)


def _bn1d_streaming(x, gamma, beta2d, block_budget, vmem_limit):
    N, F = x.shape
    tb, tf = _choose_stream_tiles(N, F, block_budget)
    nb, nf = pl.cdiv(N, tb), pl.cdiv(F, tf)

    # Pass 1: per-feature scale/bias via sum & sum-of-squares accumulation.
    stats_kernel = functools.partial(_bn1d_stats_kernel, n_total=N)
    scale, bias = pl.pallas_call(
        stats_kernel,
        out_shape=(jax.ShapeDtypeStruct((1, F), jnp.float32),
                   jax.ShapeDtypeStruct((1, F), jnp.float32)),
        grid=(nf, nb),
        in_specs=[
            pl.BlockSpec(memory_space=pltpu.MemorySpace.SMEM),      # gamma scalar
            pl.BlockSpec((tb, tf), lambda j, b: (b, j)),            # x (batch, feature) tile
            pl.BlockSpec((1, tf), lambda j, b: (0, j)),             # beta row tile
        ],
        out_specs=(pl.BlockSpec((1, tf), lambda j, b: (0, j)),
                   pl.BlockSpec((1, tf), lambda j, b: (0, j))),
        scratch_shapes=[pltpu.VMEM((1, tf), jnp.float32),           # running sum
                        pltpu.VMEM((1, tf), jnp.float32)],          # running sum of squares
        compiler_params=pltpu.CompilerParams(
            dimension_semantics=("parallel", "arbitrary"),
            vmem_limit_bytes=vmem_limit,
        ),
        cost_estimate=pl.CostEstimate(flops=3 * N * F + 8 * F, transcendentals=F,
                                      bytes_accessed=(N * F + 3 * F + 1) * 4),
    )(gamma, x, beta2d)

    # Pass 2: stream x again, apply scale/bias.
    return pl.pallas_call(
        _bn1d_apply_kernel,
        out_shape=jax.ShapeDtypeStruct((N, F), x.dtype),
        grid=(nb, nf),
        in_specs=[
            pl.BlockSpec((tb, tf), lambda i, j: (i, j)),
            pl.BlockSpec((1, tf), lambda i, j: (0, j)),
            pl.BlockSpec((1, tf), lambda i, j: (0, j)),
        ],
        out_specs=pl.BlockSpec((tb, tf), lambda i, j: (i, j)),
        compiler_params=pltpu.CompilerParams(
            dimension_semantics=("parallel", "parallel"),
            vmem_limit_bytes=vmem_limit,
        ),
        cost_estimate=pl.CostEstimate(flops=2 * N * F, transcendentals=0,
                                      bytes_accessed=(2 * N * F + 2 * F) * 4),
    )(x, scale, bias)


def batchnorm1d_forward(x, gamma, beta, *, force_streaming=False, block_budget_bytes=None):
    """x: (N, F) float32, gamma: (1,) float32, beta: (F,) float32 -> (N, F)."""
    N, F = x.shape
    assert N > 1, "unbiased variance (N-1 divisor) requires N > 1"

    block_budget, vmem_limit = _hw_budgets()
    if block_budget_bytes is not None:
        block_budget = block_budget_bytes

    beta2d = beta.reshape(1, F)

    tf = None if force_streaming else _choose_feature_tile(N, F, block_budget)
    if tf is not None:
        return _bn1d_single_block(x, gamma, beta2d, tf, vmem_limit)
    # Batch no longer fits a single VMEM block -> streaming sum/sum-of-squares path.
    return _bn1d_streaming(x, gamma, beta2d, block_budget, vmem_limit)


def batchnorm1d_reference(x, gamma, beta):
    mu = jnp.mean(x, axis=0)
    var = jnp.var(x, axis=0, ddof=1)  # unbiased, like torch.var default
    z = (x - mu) / jnp.sqrt(var + EPS)
    return gamma * z + beta


if __name__ == "__main__":
    key = jax.random.PRNGKey(0)
    k_x, k_gamma, k_x2, k_beta2, k_x3, k_beta3 = jax.random.split(key, 6)

    # Small shape consistent with the module: BatchNorm1D(input_size=32), batch 8.
    # Parameter init mirrors __init__: gamma ~ U[0,1) scalar, beta = zeros(F).
    N, F = 8, 32
    x = jax.random.normal(k_x, (N, F), dtype=jnp.float32)
    gamma = jax.random.uniform(k_gamma, (1,), dtype=jnp.float32)
    beta = jnp.zeros((F,), dtype=jnp.float32)

    y = jax.block_until_ready(batchnorm1d_forward(x, gamma, beta))
    y_ref = batchnorm1d_reference(x, gamma, beta)
    assert y.shape == (N, F)
    assert jnp.allclose(y, y_ref, atol=1e-4, rtol=1e-4), "mismatch (single-block, F<128)"

    # Multi-tile feature grid: F a multiple of 128 -> unpadded, TF divides F, nf >= 2.
    N2, F2 = 64, 256
    x2 = jax.random.normal(k_x2, (N2, F2), dtype=jnp.float32)
    beta2 = jax.random.normal(k_beta2, (F2,), dtype=jnp.float32) * 0.1
    y2 = jax.block_until_ready(batchnorm1d_forward(x2, gamma, beta2))
    y2_ref = batchnorm1d_reference(x2, gamma, beta2)
    assert jnp.allclose(y2, y2_ref, atol=1e-4, rtol=1e-4), "mismatch (multi-tile)"

    # Streaming (large-N) path exercised at a small shape by forcing it with a tiny
    # block budget: ragged batch blocks (80 = 3*24 + 8) and a ragged last feature
    # tile (160 = 128 + 32).
    N3, F3 = 80, 160
    x3 = jax.random.normal(k_x3, (N3, F3), dtype=jnp.float32)
    beta3 = jax.random.normal(k_beta3, (F3,), dtype=jnp.float32) * 0.1
    y3 = jax.block_until_ready(
        batchnorm1d_forward(x3, gamma, beta3,
                            force_streaming=True, block_budget_bytes=16 * 1024))
    y3_ref = batchnorm1d_reference(x3, gamma, beta3)
    assert jnp.allclose(y3, y3_ref, atol=1e-3, rtol=1e-3), "mismatch (streaming)"

    print("KERNEL_OK")
</pallas_src>

<mosaic_0001>
module attributes {stable_mosaic.version = 11 : i64} {
  func.func @_bn1d_block_kernel(%arg0: i32, %arg1: memref<1xf32, #tpu.memory_space<smem>>, %arg2: memref<8x32xf32, #tpu.memory_space<vmem>>, %arg3: memref<1x32xf32, #tpu.memory_space<vmem>>, %arg4: memref<8x32xf32, #tpu.memory_space<vmem>>) attributes {dimension_semantics = [#tpu.dimension_semantics<parallel>], iteration_bounds = array<i64: 1>, scalar_prefetch = 0 : i64, scratch_operands = 0 : i64, tpu.core_type = #tpu.core_type<tc>, window_params = [{transform_indices = @transform_0, window_bounds = array<i64: 1>}, {transform_indices = @transform_1, window_bounds = array<i64: 8, 32>}, {transform_indices = @transform_2, window_bounds = array<i64: 1, 32>}, {transform_indices = @transform_3, window_bounds = array<i64: 8, 32>}]} {
    %c0 = arith.constant 0 : index
    %c0_0 = arith.constant 0 : index
    %0 = vector.load %arg2[%c0, %c0_0] : memref<8x32xf32, #tpu.memory_space<vmem>>, vector<8x32xf32>
    %cst = arith.constant dense<0.000000e+00> : vector<32xf32>
    %1 = vector.multi_reduction <add>, %0, %cst [0] : vector<8x32xf32> to vector<32xf32>
    %2 = vector.shape_cast %1 : vector<32xf32> to vector<1x32xf32>
    %cst_1 = arith.constant 8.000000e+00 : f32
    %3 = vector.broadcast %cst_1 : f32 to vector<1x32xf32>
    %4 = arith.divf %2, %3 : vector<1x32xf32>
    %5 = vector.broadcast %4 : vector<1x32xf32> to vector<8x32xf32>
    %6 = arith.subf %0, %5 : vector<8x32xf32>
    %7 = arith.mulf %6, %6 : vector<8x32xf32>
    %cst_2 = arith.constant dense<0.000000e+00> : vector<32xf32>
    %8 = vector.multi_reduction <add>, %7, %cst_2 [0] : vector<8x32xf32> to vector<32xf32>
    %9 = vector.shape_cast %8 : vector<32xf32> to vector<1x32xf32>
    %cst_3 = arith.constant 7.000000e+00 : f32
    %10 = vector.broadcast %cst_3 : f32 to vector<1x32xf32>
    %11 = arith.divf %9, %10 : vector<1x32xf32>
    %c0_4 = arith.constant 0 : index
    %12 = memref.load %arg1[%c0_4] : memref<1xf32, #tpu.memory_space<smem>>
    %cst_5 = arith.constant 9.99999974E-6 : f32
    %13 = vector.broadcast %cst_5 : f32 to vector<1x32xf32>
    %14 = arith.addf %11, %13 : vector<1x32xf32>
    %15 = math.rsqrt %14 : vector<1x32xf32>
    %16 = vector.broadcast %12 : f32 to vector<1x32xf32>
    %17 = arith.mulf %16, %15 : vector<1x32xf32>
    %18 = vector.broadcast %17 : vector<1x32xf32> to vector<8x32xf32>
    %19 = arith.mulf %6, %18 : vector<8x32xf32>
    %c0_6 = arith.constant 0 : index
    %c0_7 = arith.constant 0 : index
    %20 = vector.load %arg3[%c0_6, %c0_7] : memref<1x32xf32, #tpu.memory_space<vmem>>, vector<1x32xf32>
    %21 = vector.broadcast %20 : vector<1x32xf32> to vector<8x32xf32>
    %22 = arith.addf %19, %21 : vector<8x32xf32>
    %c0_8 = arith.constant 0 : index
    %c0_9 = arith.constant 0 : index
    %23 = vector.load %arg4[%c0_8, %c0_9] : memref<8x32xf32, #tpu.memory_space<vmem>>, vector<8x32xf32>
    tpu.vector_store %arg4[%c0_8, %c0_9], %22 {strides = array<i32>} : memref<8x32xf32, #tpu.memory_space<vmem>>, vector<8x32xf32>,
    return
  }
  func.func @transform_0(%arg0: i32) -> i32 {
    %c0_i32 = arith.constant 0 : i32
    %c0_i32_0 = arith.constant 0 : i32
    return %c0_i32 : i32
  }
  func.func @transform_1(%arg0: i32) -> (i32, i32) {
    %c0_i32 = arith.constant 0 : i32
    %c0_i32_0 = arith.constant 0 : i32
    return %c0_i32, %arg0 : i32, i32
  }
  func.func @transform_2(%arg0: i32) -> (i32, i32) {
    %c0_i32 = arith.constant 0 : i32
    %c0_i32_0 = arith.constant 0 : i32
    return %c0_i32, %arg0 : i32, i32
  }
  func.func @transform_3(%arg0: i32) -> (i32, i32) {
    %c0_i32 = arith.constant 0 : i32
    %c0_i32_0 = arith.constant 0 : i32
    return %c0_i32, %arg0 : i32, i32
  }
}

</mosaic_0001>

<llo_original>
// kernel: tpu_custom_call.1
$region0: #{tpu_custom_call.1}
  #allocation0 [shape = 'u32[]', space=smem, size = 0x4, offset = 0x4, fixed_abs, tag = 'smem constant byte address 0x4 - core index']
  #allocation1 [shape = 'u32[144,128]{1,0:T(1,128)}', space=vmem, size = 0x12000, scoped, tag = 'internal scratch']
  #allocation2 [shape = 'f32[1]{0:T(128)S(6)}', space=smem, size = 0x200, scoped, tag = 'scoped memory for tpu_custom_call.1']
  %s0 = inlined_call_operand.<no memory space> [shape: f32[1], index: 0, kind: input, shape index: {}]
  %s1 = inlined_call_operand.hbm [shape: f32[8,32], index: 1, kind: input, shape index: {}]
  %s2 = inlined_call_operand.vmem [shape: f32[1,32], index: 2, kind: input, shape index: {}]
  %s3 = inlined_call_operand.hbm [shape: f32[8,32], index: 3, kind: output, shape index: {}]
  %s4 = sld [smem:[#allocation0]]
  $region26: #{tpu_custom_call.1} parent=0
    _
  %s6 = ssub.s32 1, %s4
  %s7 = scalar_select 0, %s6, %s4
  %8 = sst [smem:[#allocation2]] %s0
  $region1: #{tpu_custom_call.1} parent=0
    #allocation3 [shape = 'u8[4096]{0}', space=vmem, size = 0x1000, scoped, tag = 'input window, operand 1, single buffered']
    #allocation4 [shape = 's32[1]{0}', space=sflag, size = 0x4, scoped, tag = 'scoped memory for tpu_custom_call.1']
    #allocation5 [shape = 's32[1]{0}', space=sflag, size = 0x4, scoped, tag = 'scoped memory for tpu_custom_call.1']
    #allocation6 [shape = 'u8[4096]{0}', space=vmem, size = 0x1000, scoped, tag = 'output window, operand 0, single buffered']
    %9 = vsyncpa [#allocation4], 0
    %10 = vsyncpa [#allocation5], 0
    // Predicated region
    $region2: #{tpu_custom_call.1} parent=1 // pred_check
      _
    $region3: #{tpu_custom_call.1} parent=1 // pred_check_branch
      %12 = sbr.rel (0) target = $region5
    $region4: #{tpu_custom_call.1} parent=1 // pred_region
      _
    $region5: #{tpu_custom_call.1} parent=1 // pred_fallthru
      _
    // Predicated region
    $region6: #{tpu_custom_call.1} parent=1 // pred_check
      _
    $region7: #{tpu_custom_call.1} parent=1 // pred_check_branch
      %14 = sbr.rel (0) target = $region9
    $region8: #{tpu_custom_call.1} parent=1 // pred_region
      %s16 = ssub.s32 128, 128
      %17 = vsyncadd [#allocation4], %s16
      %s19 = sshll.u32 [#allocation3], 4
      %s20 = int_to_ptr.vmem [resolvable:$true] %s19
      %22 = dma.hbm_to_vmem [thread:$0]  %s1, 128, %s20, [#allocation4]
    $region9: #{tpu_custom_call.1} parent=1 // pred_fallthru
      _
    // Predicated region
    $region10: #{tpu_custom_call.1} parent=1 // pred_check
      _
    $region11: #{tpu_custom_call.1} parent=1 // pred_check_branch
      %24 = sbr.rel (0) target = $region13
    $region12: #{tpu_custom_call.1} parent=1 // pred_region
      _
    $region13: #{tpu_custom_call.1} parent=1 // pred_fallthru
      _
    // Predicated region
    $region14: #{tpu_custom_call.1} parent=1 // pred_check
      _
    $region15: #{tpu_custom_call.1} parent=1 // pred_check_branch
      %26 = sbr.rel (0) target = $region17
    $region16: #{tpu_custom_call.1} parent=1 // pred_region
      %27 = dma.done [#allocation4], 128
    $region17: #{tpu_custom_call.1} parent=1 // pred_fallthru
      _
    %v28 = vld [vmem:[#allocation3] sm:$0xff]
    %vm29 = vcmask 261120
    %v30 = vsel %vm29, %v28, 0.0
    %v31 = vrot.slane %v30, 4
    %v32 = vadd.f32 %v30, %v31
    %v33 = vrot.slane %v32, 2
    %v34 = vadd.f32 %v32, %v33
    %v35 = vrot.slane %v34, 1
    %v36 = vadd.f32 %v34, %v35
    %v37 = vrcp.pop 8.0
    %v38 = vmul.f32 %v36, %v37
    %v39 = vsub.f32 %v28, %v38
    %v40 = vmul.f32 %v39, %v39
    %v41 = vsel %vm29, %v40, 0.0
    %v42 = vrot.slane %v41, 4
    %v43 = vadd.f32 %v41, %v42
    %v44 = vrot.slane %v43, 2
    %v45 = vadd.f32 %v43, %v44
    %v46 = vrot.slane %v45, 1
    %v47 = vadd.f32 %v45, %v46
    %v48 = vrcp.pop 7.0
    %v49 = vmul.f32 %v47, %v48
    %s50 = sld [smem:[#allocation2]]
    %v51 = vadd.f32 %v49, 1e-05
    %v52 = vrsqrt.pop %v51
    %v53 = vstv %s50
    %v54 = vmul.f32 %v53, %v52
    %v55 = vmul.f32 %v39, %v54
    %v56 = vld [vmem:[%s2] sm:$0x1]
    %v58 = vlaneseq
    %v59 = vshrl.u32 %v58, 7
    %v60 = vsub.s32 0, %v59
    %v61 = vrot.slane %v56, %v60
    %v63 = vadd.f32 %v55, %v61
    %64 = vst.msk [vmem:[#allocation6] sm:$0xff] %vm29, %v63
    // Predicated region
    $region18: #{tpu_custom_call.1} parent=1 // pred_check
      _
    $region19: #{tpu_custom_call.1} parent=1 // pred_check_branch
      %66 = sbr.rel (0) target = $region21
    $region20: #{tpu_custom_call.1} parent=1 // pred_region
      %s68 = ssub.s32 128, 128
      %69 = vsyncadd [#allocation5], %s68
      %s71 = sshll.u32 [#allocation6], 4
      %s72 = int_to_ptr.vmem [resolvable:$true] %s71
      %74 = dma.vmem_to_hbm [thread:$0]  %s72, 128, %s3, [#allocation5]
    $region21: #{tpu_custom_call.1} parent=1 // pred_fallthru
      _
    // Predicated region
    $region22: #{tpu_custom_call.1} parent=1 // pred_check
      _
    $region23: #{tpu_custom_call.1} parent=1 // pred_check_branch
      %76 = sbr.rel (0) target = $region25
    $region24: #{tpu_custom_call.1} parent=1 // pred_region
      %77 = dma.done [#allocation5], 128
    $region25: #{tpu_custom_call.1} parent=1 // pred_fallthru
      _
    %78 = vsyncpa [#allocation4], 1
    %79 = vsyncpa [#allocation5], 1

</llo_original>
